<compile_context>
chip_gen: v5e
topology: v5e:2x2
jax: 0.10.0
libtpu: 0.0.40
codegen_flags: <defaults>
</compile_context>

<pallas_src>
import jax
import jax.numpy as jnp
from jax.experimental import pallas as pl
from jax.experimental.pallas import tpu as pltpu


def make_hypernet_forward(emb_table, to_weight, to_bias, D_img, D_txt):
    """Init-time parameter prep + returns a jitted per-call forward.

    emb_table: (K, E) float. to_weight: (E, Limg*Ltxt). to_bias: (E, Limg).
    D_img / D_txt: static Python ints (<= Limg / Ltxt).
    forward(x): x (B,) int encoder ids ->
        (weights (B, D_img, D_txt) f32, biases (B, D_img) f32)
    """
    K, E = emb_table.shape
    Nw = D_img * D_txt
    Nb = D_img
    N = Nw + Nb

    # ---- init-time (runs once, NOT per forward call) ----------------------
    # TODO(synk): the original `embs[i] @ self.to_weight.T` is shape-inconsistent
    # with the declared (E, Limg*Ltxt) parameter; `embs @ to_weight` is the only
    # shape-valid reading (it mirrors the `embs[i] @ self.to_bias` line).
    proj = jnp.concatenate(
        [to_weight[:, :Nw], to_bias[:, :Nb]], axis=1).astype(jnp.float32)   # (E, N)
    table = emb_table.astype(jnp.float32)                                   # (K, E)
    # (Stronger init-time variant would fold `table @ proj` too, reducing the
    #  kernel to a pure row gather; kept as two dots to mirror the module.)

    def _hnet_kernel(x_sref, emb_ref, proj_ref, w_ref, b_ref):
        B = w_ref.shape[0]
        # One-hot "gather" built from the SMEM-prefetched indices: fully
        # vectorized VPU compares, no per-row scalar-addressed VMEM loads, and
        # an id >= K simply selects nothing (no OOB VMEM read possible).
        row_ids = jax.lax.broadcasted_iota(jnp.int32, (B, K), 0)
        col_ids = jax.lax.broadcasted_iota(jnp.int32, (B, K), 1)
        one_hot = jnp.zeros((B, K), jnp.float32)
        for i in range(B):                                   # B is static
            one_hot = one_hot + jnp.where(
                (row_ids == i) & (col_ids == x_sref[i]), 1.0, 0.0)
        # Embedding lookup + fused [weight | bias] projection: two tiny MXU passes.
        embs = jnp.dot(one_hot, emb_ref[...], preferred_element_type=jnp.float32)
        out = jnp.dot(embs, proj_ref[...], preferred_element_type=jnp.float32)
        # Two direct outputs -> no post-kernel lane-dim slices.
        w_ref[...] = out[:, :Nw]
        b_ref[...] = out[:, Nw:N]

    @jax.jit
    def forward(x):
        x = x.astype(jnp.int32)
        B = x.shape[0]     # NOTE: distinct batch sizes recompile (static shape).
        weights_flat, biases = pl.pallas_call(
            _hnet_kernel,
            out_shape=(
                jax.ShapeDtypeStruct((B, Nw), jnp.float32),
                jax.ShapeDtypeStruct((B, Nb), jnp.float32),
            ),
            grid_spec=pltpu.PrefetchScalarGridSpec(
                num_scalar_prefetch=1,                        # x -> SMEM
                grid=(1,),
                in_specs=[
                    pl.BlockSpec((K, E), lambda i, x_ref: (0, 0)),  # full table
                    pl.BlockSpec((E, N), lambda i, x_ref: (0, 0)),  # fused proj
                ],
                out_specs=[
                    pl.BlockSpec((B, Nw), lambda i, x_ref: (0, 0)),
                    pl.BlockSpec((B, Nb), lambda i, x_ref: (0, 0)),
                ],
            ),
            compiler_params=pltpu.CompilerParams(
                dimension_semantics=("arbitrary",)),
        )(x, table, proj)
        # TODO(synk): reshaping the first D_img*D_txt flat outputs to
        # (D_img, D_txt) matches PyTorch only when D_txt == Ltxt (same caveat
        # as the original `.view(D_img, D_txt)` on a truncated row).
        weights = weights_flat.reshape(B, D_img, D_txt)
        return weights, biases

    return forward


if __name__ == "__main__":
    # Small "args" consistent with the module's __init__
    num_image_encoders = 4
    hnet_cond_emb_dim = 32      # E
    largest_image_dim = 16      # Limg
    largest_text_dim = 8        # Ltxt
    D_img, D_txt = 8, 8         # requested (<= largest) dims for this call

    key = jax.random.PRNGKey(0)
    k_emb, k_w, k_b = jax.random.split(key, 3)

    emb_table = jax.random.normal(
        k_emb, (num_image_encoders, hnet_cond_emb_dim), dtype=jnp.float32)
    to_weight = jax.random.normal(
        k_w, (hnet_cond_emb_dim, largest_image_dim * largest_text_dim),
        dtype=jnp.float32) * 0.02
    to_bias = jax.random.normal(
        k_b, (hnet_cond_emb_dim, largest_image_dim), dtype=jnp.float32) * 0.02

    x = jnp.array([1, 3], dtype=jnp.int32)            # batch of encoder ids, B=2

    forward = make_hypernet_forward(emb_table, to_weight, to_bias, D_img, D_txt)
    weights, biases = forward(x)
    jax.block_until_ready((weights, biases))

    # Pure-JAX reference check (same math, no Pallas)
    embs_ref = emb_table[x]
    w_ref = (embs_ref @ to_weight)[:, : D_img * D_txt].reshape(-1, D_img, D_txt)
    b_ref = (embs_ref @ to_bias)[:, :D_img]
    assert jnp.allclose(weights, w_ref, atol=1e-5, rtol=1e-5), "weights mismatch"
    assert jnp.allclose(biases, b_ref, atol=1e-5, rtol=1e-5), "biases mismatch"

    print("KERNEL_OK")
</pallas_src>

<mosaic_0001>
module attributes {stable_mosaic.version = 11 : i64} {
  func.func @_hnet_kernel(%arg0: i32, %arg1: memref<2xi32, #tpu.memory_space<smem>>, %arg2: memref<4x32xf32, #tpu.memory_space<vmem>>, %arg3: memref<32x72xf32, #tpu.memory_space<vmem>>, %arg4: memref<2x64xf32, #tpu.memory_space<vmem>>, %arg5: memref<2x8xf32, #tpu.memory_space<vmem>>) attributes {dimension_semantics = [#tpu.dimension_semantics<arbitrary>], iteration_bounds = array<i64: 1>, scalar_prefetch = 1 : i64, scratch_operands = 0 : i64, tpu.core_type = #tpu.core_type<tc>, window_params = [{pipeline_mode = #tpu.pipeline_mode<synchronous>, transform_indices = @transform_0, window_bounds = array<i64: 4, 32>}, {pipeline_mode = #tpu.pipeline_mode<synchronous>, transform_indices = @transform_1, window_bounds = array<i64: 32, 72>}, {pipeline_mode = #tpu.pipeline_mode<synchronous>, transform_indices = @transform_2, window_bounds = array<i64: 2, 64>}, {pipeline_mode = #tpu.pipeline_mode<synchronous>, transform_indices = @transform_3, window_bounds = array<i64: 2, 8>}]} {
    %0 = tpu.iota {dimensions = array<i32: 0>} : vector<2x4xi32>
    %1 = tpu.iota {dimensions = array<i32: 1>} : vector<2x4xi32>
    %cst = arith.constant 0.000000e+00 : f32
    %2 = vector.broadcast %cst : f32 to vector<2x4xf32>
    %c0_i32 = arith.constant 0 : i32
    %3 = vector.broadcast %c0_i32 : i32 to vector<2x4xi32>
    %4 = arith.cmpi eq, %0, %3 : vector<2x4xi32>
    %c0 = arith.constant 0 : index
    %5 = memref.load %arg1[%c0] : memref<2xi32, #tpu.memory_space<smem>>
    %6 = vector.broadcast %5 : i32 to vector<2x4xi32>
    %7 = arith.cmpi eq, %1, %6 : vector<2x4xi32>
    %8 = arith.andi %4, %7 : vector<2x4xi1>
    %cst_0 = arith.constant 1.000000e+00 : f32
    %cst_1 = arith.constant 0.000000e+00 : f32
    %9 = vector.broadcast %cst_0 : f32 to vector<2x4xf32>
    %10 = vector.broadcast %cst_1 : f32 to vector<2x4xf32>
    %11 = arith.select %8, %9, %10 : vector<2x4xi1>, vector<2x4xf32>
    %12 = arith.addf %2, %11 : vector<2x4xf32>
    %c1_i32 = arith.constant 1 : i32
    %13 = vector.broadcast %c1_i32 : i32 to vector<2x4xi32>
    %14 = arith.cmpi eq, %0, %13 : vector<2x4xi32>
    %c1 = arith.constant 1 : index
    %15 = memref.load %arg1[%c1] : memref<2xi32, #tpu.memory_space<smem>>
    %16 = vector.broadcast %15 : i32 to vector<2x4xi32>
    %17 = arith.cmpi eq, %1, %16 : vector<2x4xi32>
    %18 = arith.andi %14, %17 : vector<2x4xi1>
    %cst_2 = arith.constant 1.000000e+00 : f32
    %cst_3 = arith.constant 0.000000e+00 : f32
    %19 = vector.broadcast %cst_2 : f32 to vector<2x4xf32>
    %20 = vector.broadcast %cst_3 : f32 to vector<2x4xf32>
    %21 = arith.select %18, %19, %20 : vector<2x4xi1>, vector<2x4xf32>
    %22 = arith.addf %12, %21 : vector<2x4xf32>
    %c0_4 = arith.constant 0 : index
    %c0_5 = arith.constant 0 : index
    %23 = vector.load %arg2[%c0_4, %c0_5] : memref<4x32xf32, #tpu.memory_space<vmem>>, vector<4x32xf32>
    %cst_6 = arith.constant dense<0.000000e+00> : vector<2x32xf32>
    %24 = tpu.matmul %22, %23, %cst_6 {dimension_numbers = #tpu.dot_dimension_numbers<[1], [0], [0], [1], [0, 0, 1, 1], [], []>} : vector<2x4xf32>, vector<4x32xf32>, vector<2x32xf32> -> vector<2x32xf32>
    %c0_7 = arith.constant 0 : index
    %c0_8 = arith.constant 0 : index
    %25 = vector.load %arg3[%c0_7, %c0_8] : memref<32x72xf32, #tpu.memory_space<vmem>>, vector<32x72xf32>
    %cst_9 = arith.constant dense<0.000000e+00> : vector<2x72xf32>
    %26 = tpu.matmul %24, %25, %cst_9 {dimension_numbers = #tpu.dot_dimension_numbers<[1], [0], [0], [1], [0, 0, 1, 1], [], []>} : vector<2x32xf32>, vector<32x72xf32>, vector<2x72xf32> -> vector<2x72xf32>
    %27 = vector.extract_strided_slice %26 {offsets = [0, 0], sizes = [2, 64], strides = [1, 1]} : vector<2x72xf32> to vector<2x64xf32>
    %c0_10 = arith.constant 0 : index
    %c0_11 = arith.constant 0 : index
    %28 = vector.load %arg4[%c0_10, %c0_11] : memref<2x64xf32, #tpu.memory_space<vmem>>, vector<2x64xf32>
    tpu.vector_store %arg4[%c0_10, %c0_11], %27 {strides = array<i32>} : memref<2x64xf32, #tpu.memory_space<vmem>>, vector<2x64xf32>,
    %29 = vector.extract_strided_slice %26 {offsets = [0, 64], sizes = [2, 8], strides = [1, 1]} : vector<2x72xf32> to vector<2x8xf32>
    %c0_12 = arith.constant 0 : index
    %c0_13 = arith.constant 0 : index
    %30 = vector.load %arg5[%c0_12, %c0_13] : memref<2x8xf32, #tpu.memory_space<vmem>>, vector<2x8xf32>
    tpu.vector_store %arg5[%c0_12, %c0_13], %29 {strides = array<i32>} : memref<2x8xf32, #tpu.memory_space<vmem>>, vector<2x8xf32>,
    return
  }
  func.func @transform_0(%arg0: i32, %arg1: memref<2xi32, #tpu.memory_space<smem>>) -> (i32, i32) {
    %c0_i32 = arith.constant 0 : i32
    %c0_i32_0 = arith.constant 0 : i32
    %c0_i32_1 = arith.constant 0 : i32
    return %c0_i32, %c0_i32_0 : i32, i32
  }
  func.func @transform_1(%arg0: i32, %arg1: memref<2xi32, #tpu.memory_space<smem>>) -> (i32, i32) {
    %c0_i32 = arith.constant 0 : i32
    %c0_i32_0 = arith.constant 0 : i32
    %c0_i32_1 = arith.constant 0 : i32
    return %c0_i32, %c0_i32_0 : i32, i32
  }
  func.func @transform_2(%arg0: i32, %arg1: memref<2xi32, #tpu.memory_space<smem>>) -> (i32, i32) {
    %c0_i32 = arith.constant 0 : i32
    %c0_i32_0 = arith.constant 0 : i32
    %c0_i32_1 = arith.constant 0 : i32
    return %c0_i32, %c0_i32_0 : i32, i32
  }
  func.func @transform_3(%arg0: i32, %arg1: memref<2xi32, #tpu.memory_space<smem>>) -> (i32, i32) {
    %c0_i32 = arith.constant 0 : i32
    %c0_i32_0 = arith.constant 0 : i32
    %c0_i32_1 = arith.constant 0 : i32
    return %c0_i32, %c0_i32_0 : i32, i32
  }
}

</mosaic_0001>

<llo_original>
// kernel: forward.1
$region0: #{forward.1}
  #allocation0 [shape = 'u32[]', space=smem, size = 0x4, offset = 0x4, fixed_abs, tag = 'smem constant byte address 0x4 - core index']
  #allocation1 [shape = 'u32[72,128]{1,0:T(1,128)}', space=vmem, size = 0x9000, scoped, tag = 'internal scratch']
  #allocation2 [shape = 's32[1]{0}', space=sflag, size = 0x4, scoped, tag = 'scoped memory for forward.1']
  #allocation3 [shape = 'u8[512]{0}', space=smem, size = 0x200, scoped, tag = 'prefetched SMEM operand 0']
  %s0 = inlined_call_operand.hbm [shape: s32[2], index: 0, kind: input, shape index: {}]
  %s1 = inlined_call_operand.hbm [shape: f32[4,32], index: 1, kind: input, shape index: {}]
  %s2 = inlined_call_operand.hbm [shape: f32[32,72], index: 2, kind: input, shape index: {}]
  %s3 = inlined_call_operand.vmem [shape: f32[2,64], index: 3, kind: output, shape index: {0}]
  %s4 = inlined_call_operand.hbm [shape: f32[2,8], index: 4, kind: output, shape index: {1}]
  %5 = xla_tuple %s3, %s4
  %s6 = sld [smem:[#allocation0]]
  $region34: #{forward.1} parent=0
    _
  %s8 = ssub.s32 1, %s6
  %s9 = scalar_select 0, %s8, %s6
  %s11 = sshll.u32 %s0, 4
  %s12 = int_to_ptr.hbm [resolvable:$true] %s11
  %14 = dma.hbm_to_smem %s12, 16, [#allocation3], [#allocation2]
  %16 = dma.done [#allocation2], 16
  %17 = sfence
  $region1: #{forward.1} parent=0
    #allocation4 [shape = 'u8[2048]{0}', space=vmem, size = 0x800, scoped, tag = 'input window, operand 1, single buffered']
    #allocation5 [shape = 's32[1]{0}', space=sflag, size = 0x4, scoped, tag = 'scoped memory for forward.1']
    #allocation6 [shape = 's32[1]{0}', space=sflag, size = 0x4, scoped, tag = 'scoped memory for forward.1']
    #allocation7 [shape = 'u8[16384]{0}', space=vmem, size = 0x4000, scoped, tag = 'input window, operand 2, single buffered']
    #allocation8 [shape = 's32[1]{0}', space=sflag, size = 0x4, scoped, tag = 'scoped memory for forward.1']
    #allocation9 [shape = 'u8[1024]{0}', space=vmem, size = 0x400, scoped, tag = 'output window, operand 1, single buffered']
    %18 = vsyncpa [#allocation5], 0
    %19 = vsyncpa [#allocation8], 0
    %20 = vsyncpa [#allocation6], 0
    // Predicated region
    $region2: #{forward.1} parent=1 // pred_check
      _
    $region3: #{forward.1} parent=1 // pred_check_branch
      %22 = sbr.rel (0) target = $region5
    $region4: #{forward.1} parent=1 // pred_region
      %24 = vsyncadd [#allocation5], 0
      %s26 = sshll.u32 %s1, 4
      %s27 = int_to_ptr.hbm [resolvable:$true] %s26
      %s28 = sshll.u32 [#allocation4], 4
      %s29 = int_to_ptr.vmem [resolvable:$true] %s28
      %31 = dma.hbm_to_vmem [thread:$0]  %s27, 64, %s29, [#allocation5]
    $region5: #{forward.1} parent=1 // pred_fallthru
      _
    // Predicated region
    $region6: #{forward.1} parent=1 // pred_check
      _
    $region7: #{forward.1} parent=1 // pred_check_branch
      %33 = sbr.rel (0) target = $region9
    $region8: #{forward.1} parent=1 // pred_region
      %35 = vsyncadd [#allocation8], 0
      %s36 = sshll.u32 %s2, 4
      %s37 = int_to_ptr.hbm [resolvable:$true] %s36
      %s38 = sshll.u32 [#allocation7], 4
      %s39 = int_to_ptr.vmem [resolvable:$true] %s38
      %44 = dma.hbm_to_vmem [thread:$0]  %s37, 512, %s39, [#allocation8], 128, 128, 8
    $region9: #{forward.1} parent=1 // pred_fallthru
      _
    // Predicated region
    $region10: #{forward.1} parent=1 // pred_check
      _
    $region11: #{forward.1} parent=1 // pred_check_branch
      %46 = sbr.rel (0) target = $region13
    $region12: #{forward.1} parent=1 // pred_region
      %48 = dma.done [#allocation5], 64
    $region13: #{forward.1} parent=1 // pred_fallthru
      _
    // Predicated region
    $region14: #{forward.1} parent=1 // pred_check
      _
    $region15: #{forward.1} parent=1 // pred_check_branch
      %50 = sbr.rel (0) target = $region17
    $region16: #{forward.1} parent=1 // pred_region
      %52 = dma.done [#allocation8], 512
    $region17: #{forward.1} parent=1 // pred_fallthru
      _
    %v53 = vlaneseq
    %v54 = vshrl.u32 %v53, 7
    %v55 = vlaneseq
    %v56 = vand.u32 %v55, 127
    %vm57 = vcmp.eq.s32.totalorder %v54, 0
    %s58 = sld [smem:[#allocation3]]
    %v59 = vstv %s58
    %vm60 = vcmp.eq.s32.totalorder %v56, %v59
    %vm61 = vmand %vm57, %vm60
    %v62 = vsel %vm61, 1.0, 0.0
    %v63 = vadd.f32 %v62, 0.0
    %vm64 = vcmp.eq.s32.totalorder %v54, 1
    %s65 = sld [smem:[#allocation3 + $0x1]]
    %v66 = vstv %s65
    %vm67 = vcmp.eq.s32.totalorder %v56, %v66
    %vm68 = vmand %vm64, %vm67
    %v69 = vsel %vm68, 1.0, 0.0
    %v70 = vadd.f32 %v63, %v69
    %v71 = vld [vmem:[#allocation4] sm:$0xf]
    %vm72 = vcmask 31744
    %v74 = vsel %vm72, %v70, 0
    %vm76 = vcmask 1043456
    %v78 = vsel %vm76, %v71, 0
    %80 = vmatpush.msra.mxu0 0.0
    %81 = vmatpush.msra.mxu0 0.0
    %82 = vmatpush.msra.mxu0 0.0
    %83 = vmatpush.msra.mxu0 0.0
    %84 = vmatpush.msra.mxu0 0.0
    %85 = vmatpush.msra.mxu0 0.0
    %86 = vmatpush.msra.mxu0 0.0
    %87 = vmatpush.msra.mxu0 0.0
    %88 = vmatpush.msra.mxu0 0.0
    %89 = vmatpush.msra.mxu0 0.0
    %90 = vmatpush.msra.mxu0 0.0
    %91 = vmatpush.msra.mxu0 0.0
    %92 = vmatpush.msra.mxu0 0.0
    %93 = vmatpush.msra.mxu0 0.0
    %94 = vmatpush.msra.mxu0 0.0
    %95 = vmatpush.msra.mxu0 %v78
    %96 = vmatmul.f32.gmra.mxu0 %v74
    %v97 = vpop.f32.mrf.mxu0
    %v98 = vadd.f32 0.0, %v97
    %99 = vdwg.mxu0
    %v100 = vld [vmem:[#allocation7] sm:$0xff]
    %v101 = vld [vmem:[#allocation7 + $0x8] sm:$0xff]
    %v102 = vld [vmem:[#allocation7 + $0x10] sm:$0xff]
    %v103 = vld [vmem:[#allocation7 + $0x18] sm:$0xff]
    %vm104 = vcmask 261120
    %v106 = vsel %vm104, %v98, 0
    %108 = vmatpush.msra.mxu0 0.0
    %109 = vmatpush.msra.mxu0 0.0
    %110 = vmatpush.msra.mxu0 0.0
    %111 = vmatpush.msra.mxu0 0.0
    %112 = vmatpush.msra.mxu0 0.0
    %113 = vmatpush.msra.mxu0 0.0
    %114 = vmatpush.msra.mxu0 0.0
    %115 = vmatpush.msra.mxu0 0.0
    %116 = vmatpush.msra.mxu0 0.0
    %117 = vmatpush.msra.mxu0 0.0
    %118 = vmatpush.msra.mxu0 0.0
    %119 = vmatpush.msra.mxu0 0.0
    %120 = vmatpush.msra.mxu0 %v103
    %121 = vmatpush.msra.mxu0 %v102
    %122 = vmatpush.msra.mxu0 %v101
    %123 = vmatpush.msra.mxu0 %v100
    %124 = vmatmul.f32.gmra.mxu0 %v106
    %v125 = vpop.f32.mrf.mxu0
    %v126 = vadd.f32 0.0, %v125
    %127 = vdwg.mxu0
    %vm128 = vcmask 517120
    %129 = vst.msk [vmem:[%s3] sm:$0x3] %vm128, %v126
    %131 = vrot.lane.b32.xlu0 %v126, 64
    %v132 = vpop.permute.xlu0 %131
    %vm134 = vcmask 58368
    %135 = vst.msk [vmem:[#allocation9] sm:$0x3] %vm134, %v132
    // Predicated region
    $region18: #{forward.1} parent=1 // pred_check
      _
    $region19: #{forward.1} parent=1 // pred_check_branch
      %137 = sbr.rel (0) target = $region21
    $region20: #{forward.1} parent=1 // pred_region
      _
    $region21: #{forward.1} parent=1 // pred_fallthru
      _
    // Predicated region
    $region22: #{forward.1} parent=1 // pred_check
      _
    $region23: #{forward.1} parent=1 // pred_check_branch
      %139 = sbr.rel (0) target = $region25
    $region24: #{forward.1} parent=1 // pred_region
      %141 = vsyncadd [#allocation6], 0
      %s143 = sshll.u32 [#allocation9], 4
      %s144 = int_to_ptr.vmem [resolvable:$true] %s143
      %s145 = sshll.u32 %s4, 4
      %s146 = int_to_ptr.hbm [resolvable:$true] %s145
      %148 = dma.vmem_to_hbm [thread:$0]  %s144, 32, %s146, [#allocation6]
    $region25: #{forward.1} parent=1 // pred_fallthru
      _
    // Predicated region
    $region26: #{forward.1} parent=1 // pred_check
      _
    $region27: #{forward.1} parent=1 // pred_check_branch
      %150 = sbr.rel (0) target = $region29
    $region28: #{forward.1} parent=1 // pred_region
      _
    $region29: #{forward.1} parent=1 // pred_fallthru
      _
    // Predicated region
    $region30: #{forward.1} parent=1 // pred_check
      _
    $region31: #{forward.1} parent=1 // pred_check_branch
      %152 = sbr.rel (0) target = $region33
    $region32: #{forward.1} parent=1 // pred_region
      %154 = dma.done [#allocation6], 32
    $region33: #{forward.1} parent=1 // pred_fallthru
      _
    %155 = vsyncpa [#allocation5], 1
    %156 = vsyncpa [#allocation8], 1
    %157 = vsyncpa [#allocation6], 1

</llo_original>
